<compile_context>
chip_gen: v6e
topology: v6e:2x2x1
jax: 0.10.0
libtpu: 0.0.40
codegen_flags: <defaults>
</compile_context>

<pallas_src>
import functools
import math

import jax
import jax.numpy as jnp
from jax import lax
from jax.experimental import pallas as pl
from jax.experimental.pallas import tpu as pltpu


def _round_up(x, m):
    return ((x + m - 1) // m) * m


# ------------------------------ fused kernel --------------------------------

def _tracking_link_kernel(obj_ref, det_ref, wf_ref, bf_ref,
                          w1_ref, b1_ref, w2_ref, b2_ref, w3_ref, b3_ref,
                          o_ref):
    # --- fusion_module: 1x1 Conv1d + ReLU (bf16 MXU operands, f32 accum) -----
    # A 1x1 conv is per-detection, so fusing the windows == slicing the fused
    # features; fused features never leave VMEM/vregs.
    # (The obj window is only OBJ_PAD lanes wide, so it is NOT concatenated
    # with the det tile for a single fused matmul: that would force a
    # non-lane-aligned relayout of the det slab for a negligible saving.)
    # TODO(synk): fusion_module_C / affinity_module normalization layers are
    # external definitions and are not reproduced here.
    wf = wf_ref[...]                                   # (C, C_in)  bf16
    bf = bf_ref[...]                                   # (C, 1)     f32
    obj_f = jnp.maximum(
        jnp.dot(wf, obj_ref[...], preferred_element_type=jnp.float32) + bf,
        0.0).astype(jnp.bfloat16)                      # (C, OBJ_PAD)
    det_f = jnp.maximum(
        jnp.dot(wf, det_ref[...], preferred_element_type=jnp.float32) + bf,
        0.0).astype(jnp.bfloat16)                      # (C, T)

    n_obj = obj_f.shape[1]                             # static (== OBJ_PAD)
    t = det_f.shape[1]                                 # static (== det_tile)

    # --- affinity_op='multiply': batched pair expansion ----------------------
    # Each per-object piece (C, T) is lane-tile aligned (T % 128 == 0), so the
    # lane-axis concat is pure vreg placement (no sublane interleave); the
    # lane broadcasts + multiplies are VPU-only. The N*M pair tensor never
    # touches HBM.
    aff = jnp.concatenate(
        [obj_f[:, i:i + 1] * det_f for i in range(n_obj)], axis=1)  # (C, n_obj*T)

    # --- w_link MLP: exactly ONE matmul per layer over the whole slab --------
    w1, b1 = w1_ref[...], b1_ref[...]
    w2, b2 = w2_ref[...], b2_ref[...]
    w3, b3 = w3_ref[...], b3_ref[...]
    h1 = jnp.maximum(
        jnp.dot(w1, aff, preferred_element_type=jnp.float32) + b1,
        0.0).astype(jnp.bfloat16)                      # (C,  n_obj*T)
    h2 = jnp.maximum(
        jnp.dot(w2, h1, preferred_element_type=jnp.float32) + b2,
        0.0)                                           # (C2, n_obj*T) f32

    # Final 1-channel 1x1 conv: VPU multiply + cross-sublane reduction — avoids
    # a 1-row MXU matmul that wastes the systolic array.
    link = jnp.sum(h2 * w3, axis=0, keepdims=True) + b3   # (1, n_obj*T) f32

    # Scatter the per-object lane chunks onto sublanes of the lane-dense
    # (OBJ_PAD, T) output tile (tiny, one masked row-store per object row).
    for i in range(n_obj):
        o_ref[i:i + 1, :] = link[:, i * t:(i + 1) * t]


# ------------------------------ kernel wrapper -------------------------------

def _link_call(obj_raw, det_raw, params, det_tile):
    fp, lp = params["fusion"], params["link"]
    c_in, obj_pad = obj_raw.shape
    det_pad = det_raw.shape[1]
    args = (obj_raw, det_raw, fp["w"], fp["b"],
            lp["w1"], lp["b1"], lp["w2"], lp["b2"], lp["w3"], lp["b3"])
    in_specs = [
        pl.BlockSpec((c_in, obj_pad), lambda j: (0, 0)),   # obj window (resident)
        pl.BlockSpec((c_in, det_tile), lambda j: (0, j)),  # det tile
    ] + [pl.BlockSpec(a.shape, lambda j: (0, 0)) for a in args[2:]]  # weights resident
    return pl.pallas_call(
        _tracking_link_kernel,
        out_shape=jax.ShapeDtypeStruct((obj_pad, det_pad), jnp.float32),
        grid=(det_pad // det_tile,),
        in_specs=in_specs,
        out_specs=pl.BlockSpec((obj_pad, det_tile), lambda j: (0, j)),
        compiler_params=pltpu.CompilerParams(
            dimension_semantics=("parallel",)),   # det tiles are independent
    )(*args)


@functools.partial(jax.jit, static_argnames=("obj_pad", "det_pad", "det_tile"))
def _pair_step(params, raw_padded, obj_start, det_start, *,
               obj_pad, det_pad, det_tile):
    # Shape-stable extraction: dynamic starts, static padded sizes -> one
    # compiled executable reused for any dets_split with the same padded sizes.
    c_in = raw_padded.shape[0]
    zero = jnp.zeros((), jnp.int32)
    obj_raw = lax.dynamic_slice(raw_padded, (zero, obj_start), (c_in, obj_pad))
    det_raw = lax.dynamic_slice(raw_padded, (zero, det_start), (c_in, det_pad))
    return _link_call(obj_raw, det_raw, params, det_tile)


# ------------------------------ model (glue) ---------------------------------

def init_params(key, appear_len, point_len):
    # in_channels = point_len when point_len != 0 (see TrackingNet.__init__)
    c_in = appear_len + point_len
    c = point_len
    c2 = c // 2
    ks = jax.random.split(key, 8)

    def u(k, shape, fan_in):
        lim = 1.0 / math.sqrt(fan_in)
        return jax.random.uniform(k, shape, jnp.float32, -lim, lim)

    return {
        "fusion": {"w": u(ks[0], (c, c_in), c_in), "b": u(ks[1], (c, 1), c_in)},
        "link": {"w1": u(ks[2], (c, c), c),  "b1": u(ks[3], (c, 1), c),
                 "w2": u(ks[4], (c2, c), c), "b2": u(ks[5], (c2, 1), c),
                 # final 1x1-conv weight stored as a column so the kernel can
                 # apply it as a VPU multiply + sublane reduction.
                 "w3": u(ks[6], (c2, 1), c2), "b3": u(ks[7], (1, 1), c2)},
    }


def _to_kernel_params(params):
    # MXU operands in bf16, biases and the VPU-applied final weight in f32.
    fp, lp = params["fusion"], params["link"]
    return {
        "fusion": {"w": fp["w"].astype(jnp.bfloat16), "b": fp["b"]},
        "link": {"w1": lp["w1"].astype(jnp.bfloat16), "b1": lp["b1"],
                 "w2": lp["w2"].astype(jnp.bfloat16), "b2": lp["b2"],
                 "w3": lp["w3"], "b3": lp["b3"]},
    }


def tracking_net_forward(params, appear_feats, point_feats, dets_split):
    # torch.cat(feats, dim=-1).t().unsqueeze(0) -> (1, C_total, N); the batch
    # dim of 1 is dropped for the kernel and restored at the end.
    raw = jnp.concatenate([appear_feats, point_feats], axis=-1).T   # (C_in, N)
    splits = [int(s) for s in dets_split]
    if len(splits) < 2:
        return None

    # Faithful to the PyTorch forward: `start` never advances and only the
    # LAST iteration's link_mat survives, so every earlier pair is dead
    # compute.  Dispatch ONLY the final pair (i = len(splits) - 2):
    #   objs = feats[:, 0 : splits[-2]],  dets = feats[:, splits[-2] : +splits[-1]]
    n, m = splits[-2], splits[-1]
    obj_start, det_start = 0, splits[-2]

    obj_pad = _round_up(max(n, 1), 8)            # obj axis -> output sublanes
    det_pad = _round_up(max(m, 1), 128)          # det axis -> lanes (lane-dense)

    # det-tile selection (per perf review):
    #  * cap obj_pad*det_tile so the batched (C, obj_pad*det_tile) pair slab
    #    plus h1/h2 stays a few MiB of VMEM on every generation,
    #  * >= 2 tiles when det_pad >= 256 so dimension_semantics=("parallel",)
    #    can shard det tiles across v7x's two TensorCores,
    #  * otherwise prefer the largest tile (cap 2048) to amortize the
    #    ~0.35 us/grid-step overhead on single-TC v5e/v6e.
    lane_cap = max(128, ((8192 // obj_pad) // 128) * 128)
    det_tile = min(det_pad, 2048, lane_cap)
    if det_pad >= 256:
        det_tile = min(det_tile, _round_up(det_pad // 2, 128))
    det_pad = _round_up(det_pad, det_tile)
    # TODO(synk): for very large object counts the object axis should also be
    # tiled (extra grid axis); here the obj window stays resident per det tile.

    # Pad the detection axis so dynamic_slice windows never clamp their start,
    # and cast the raw features to bf16 (halves det-tile DMA traffic).
    pad_to = max(det_start + det_pad, obj_start + obj_pad)
    raw_padded = jnp.pad(raw, ((0, 0), (0, max(0, pad_to - raw.shape[1]))))
    raw_padded = raw_padded.astype(jnp.bfloat16)

    kparams = _to_kernel_params(params)
    link_pad = _pair_step(kparams, raw_padded,
                          jnp.asarray(obj_start, jnp.int32),
                          jnp.asarray(det_start, jnp.int32),
                          obj_pad=obj_pad, det_pad=det_pad, det_tile=det_tile)
    # TODO(synk): w_det / determine_det are built in __init__ but never called
    # in forward(), so they are intentionally not executed here.
    return link_pad[:n, :m][None, None]          # (1, 1, n, m)


# ------------------------------ pure-JAX reference ---------------------------

def _reference(params, appear_feats, point_feats, dets_split):
    # Full-precision, faithful replica of the PyTorch forward (including the
    # never-advancing `start` and the dead earlier iterations).
    feats = jnp.concatenate([appear_feats, point_feats], axis=-1).T
    fused = jnp.maximum(params["fusion"]["w"] @ feats + params["fusion"]["b"], 0.0)
    lp = params["link"]
    start = 0
    link_mat = None
    for i in range(len(dets_split) - 1):
        prev_end = start + int(dets_split[i])
        end = prev_end + int(dets_split[i + 1])
        objs = fused[:, start:prev_end]
        dets = fused[:, prev_end:end]
        c, nn = objs.shape
        mm = dets.shape[1]
        aff = (objs[:, :, None] * dets[:, None, :]).reshape(c, nn * mm)
        h1 = jnp.maximum(lp["w1"] @ aff + lp["b1"], 0.0)
        h2 = jnp.maximum(lp["w2"] @ h1 + lp["b2"], 0.0)
        link = (lp["w3"] * h2).sum(axis=0, keepdims=True) + lp["b3"]
        link_mat = link.reshape(1, 1, nn, mm)
    return link_mat


# ------------------------------ main ------------------------------------------

if __name__ == "__main__":
    appear_len, point_len = 32, 32
    n_total = 8
    dets_split = [3, 5]          # frame 0: 3 detections, frame 1: 5 detections

    key = jax.random.PRNGKey(0)
    k_params, k_appear, k_point = jax.random.split(key, 3)
    params = init_params(k_params, appear_len, point_len)

    # TODO(synk): AppearanceNet ('vgg') and PointNet_v1 backbones are not
    # defined in the provided module; their outputs are modeled here as
    # precomputed per-detection feature vectors.
    appear_feats = jax.random.normal(k_appear, (n_total, appear_len), jnp.float32)
    point_feats = jax.random.normal(k_point, (n_total, point_len), jnp.float32)

    link_mat = tracking_net_forward(params, appear_feats, point_feats, dets_split)
    link_mat = jax.block_until_ready(link_mat)

    ref = _reference(params, appear_feats, point_feats, dets_split)
    assert link_mat.shape == (1, 1, dets_split[-2], dets_split[-1]), link_mat.shape
    # bf16 MXU operands vs. a pure-f32 reference -> slightly loosened tolerance.
    assert jnp.allclose(link_mat, ref, atol=2e-2, rtol=2e-2), (link_mat, ref)

    print("KERNEL_OK")
</pallas_src>

<mosaic_0001>
module attributes {stable_mosaic.version = 11 : i64} {
  func.func @_tracking_link_kernel(%arg0: i32, %arg1: memref<64x8xbf16, #tpu.memory_space<vmem>>, %arg2: memref<64x128xbf16, #tpu.memory_space<vmem>>, %arg3: memref<32x64xbf16, #tpu.memory_space<vmem>>, %arg4: memref<32x1xf32, #tpu.memory_space<vmem>>, %arg5: memref<32x32xbf16, #tpu.memory_space<vmem>>, %arg6: memref<32x1xf32, #tpu.memory_space<vmem>>, %arg7: memref<16x32xbf16, #tpu.memory_space<vmem>>, %arg8: memref<16x1xf32, #tpu.memory_space<vmem>>, %arg9: memref<16x1xf32, #tpu.memory_space<vmem>>, %arg10: memref<1x1xf32, #tpu.memory_space<vmem>>, %arg11: memref<8x128xf32, #tpu.memory_space<vmem>>) attributes {dimension_semantics = [#tpu.dimension_semantics<parallel>], iteration_bounds = array<i64: 1>, scalar_prefetch = 0 : i64, scratch_operands = 0 : i64, tpu.core_type = #tpu.core_type<tc>, window_params = [{pipeline_mode = #tpu.pipeline_mode<synchronous>, transform_indices = @transform_0, window_bounds = array<i64: 64, 8>}, {transform_indices = @transform_1, window_bounds = array<i64: 64, 128>}, {pipeline_mode = #tpu.pipeline_mode<synchronous>, transform_indices = @transform_2, window_bounds = array<i64: 32, 64>}, {pipeline_mode = #tpu.pipeline_mode<synchronous>, transform_indices = @transform_3, window_bounds = array<i64: 32, 1>}, {pipeline_mode = #tpu.pipeline_mode<synchronous>, transform_indices = @transform_4, window_bounds = array<i64: 32, 32>}, {pipeline_mode = #tpu.pipeline_mode<synchronous>, transform_indices = @transform_5, window_bounds = array<i64: 32, 1>}, {pipeline_mode = #tpu.pipeline_mode<synchronous>, transform_indices = @transform_6, window_bounds = array<i64: 16, 32>}, {pipeline_mode = #tpu.pipeline_mode<synchronous>, transform_indices = @transform_7, window_bounds = array<i64: 16, 1>}, {pipeline_mode = #tpu.pipeline_mode<synchronous>, transform_indices = @transform_8, window_bounds = array<i64: 16, 1>}, {pipeline_mode = #tpu.pipeline_mode<synchronous>, transform_indices = @transform_9, window_bounds = array<i64: 1, 1>}, {transform_indices = @transform_10, window_bounds = array<i64: 8, 128>}]} {
    %c0 = arith.constant 0 : index
    %c0_0 = arith.constant 0 : index
    %0 = vector.load %arg3[%c0, %c0_0] : memref<32x64xbf16, #tpu.memory_space<vmem>>, vector<32x64xbf16>
    %c0_1 = arith.constant 0 : index
    %c0_2 = arith.constant 0 : index
    %1 = vector.load %arg4[%c0_1, %c0_2] : memref<32x1xf32, #tpu.memory_space<vmem>>, vector<32x1xf32>
    %c0_3 = arith.constant 0 : index
    %c0_4 = arith.constant 0 : index
    %2 = vector.load %arg1[%c0_3, %c0_4] : memref<64x8xbf16, #tpu.memory_space<vmem>>, vector<64x8xbf16>
    %cst = arith.constant dense<0.000000e+00> : vector<32x8xf32>
    %3 = tpu.matmul %0, %2, %cst {dimension_numbers = #tpu.dot_dimension_numbers<[1], [0], [0], [1], [0, 0, 1, 1], [], []>} : vector<32x64xbf16>, vector<64x8xbf16>, vector<32x8xf32> -> vector<32x8xf32>
    %4 = vector.broadcast %1 : vector<32x1xf32> to vector<32x8xf32>
    %5 = arith.addf %3, %4 : vector<32x8xf32>
    %cst_5 = arith.constant 0.000000e+00 : f32
    %6 = vector.broadcast %cst_5 : f32 to vector<32x8xf32>
    %7 = arith.maximumf %5, %6 : vector<32x8xf32>
    %8 = arith.truncf %7 : vector<32x8xf32> to vector<32x8xbf16>
    %c0_6 = arith.constant 0 : index
    %c0_7 = arith.constant 0 : index
    %9 = vector.load %arg2[%c0_6, %c0_7] : memref<64x128xbf16, #tpu.memory_space<vmem>>, vector<64x128xbf16>
    %cst_8 = arith.constant dense<0.000000e+00> : vector<32x128xf32>
    %10 = tpu.matmul %0, %9, %cst_8 {dimension_numbers = #tpu.dot_dimension_numbers<[1], [0], [0], [1], [0, 0, 1, 1], [], []>} : vector<32x64xbf16>, vector<64x128xbf16>, vector<32x128xf32> -> vector<32x128xf32>
    %11 = vector.broadcast %1 : vector<32x1xf32> to vector<32x128xf32>
    %12 = arith.addf %10, %11 : vector<32x128xf32>
    %cst_9 = arith.constant 0.000000e+00 : f32
    %13 = vector.broadcast %cst_9 : f32 to vector<32x128xf32>
    %14 = arith.maximumf %12, %13 : vector<32x128xf32>
    %15 = arith.truncf %14 : vector<32x128xf32> to vector<32x128xbf16>
    %16 = vector.extract_strided_slice %8 {offsets = [0, 0], sizes = [32, 1], strides = [1, 1]} : vector<32x8xbf16> to vector<32x1xbf16>
    %17 = vector.broadcast %16 : vector<32x1xbf16> to vector<32x128xbf16>
    %18 = arith.mulf %17, %15 : vector<32x128xbf16>
    %19 = vector.extract_strided_slice %8 {offsets = [0, 1], sizes = [32, 1], strides = [1, 1]} : vector<32x8xbf16> to vector<32x1xbf16>
    %20 = vector.broadcast %19 : vector<32x1xbf16> to vector<32x128xbf16>
    %21 = arith.mulf %20, %15 : vector<32x128xbf16>
    %22 = vector.extract_strided_slice %8 {offsets = [0, 2], sizes = [32, 1], strides = [1, 1]} : vector<32x8xbf16> to vector<32x1xbf16>
    %23 = vector.broadcast %22 : vector<32x1xbf16> to vector<32x128xbf16>
    %24 = arith.mulf %23, %15 : vector<32x128xbf16>
    %25 = vector.extract_strided_slice %8 {offsets = [0, 3], sizes = [32, 1], strides = [1, 1]} : vector<32x8xbf16> to vector<32x1xbf16>
    %26 = vector.broadcast %25 : vector<32x1xbf16> to vector<32x128xbf16>
    %27 = arith.mulf %26, %15 : vector<32x128xbf16>
    %28 = vector.extract_strided_slice %8 {offsets = [0, 4], sizes = [32, 1], strides = [1, 1]} : vector<32x8xbf16> to vector<32x1xbf16>
    %29 = vector.broadcast %28 : vector<32x1xbf16> to vector<32x128xbf16>
    %30 = arith.mulf %29, %15 : vector<32x128xbf16>
    %31 = vector.extract_strided_slice %8 {offsets = [0, 5], sizes = [32, 1], strides = [1, 1]} : vector<32x8xbf16> to vector<32x1xbf16>
    %32 = vector.broadcast %31 : vector<32x1xbf16> to vector<32x128xbf16>
    %33 = arith.mulf %32, %15 : vector<32x128xbf16>
    %34 = vector.extract_strided_slice %8 {offsets = [0, 6], sizes = [32, 1], strides = [1, 1]} : vector<32x8xbf16> to vector<32x1xbf16>
    %35 = vector.broadcast %34 : vector<32x1xbf16> to vector<32x128xbf16>
    %36 = arith.mulf %35, %15 : vector<32x128xbf16>
    %37 = vector.extract_strided_slice %8 {offsets = [0, 7], sizes = [32, 1], strides = [1, 1]} : vector<32x8xbf16> to vector<32x1xbf16>
    %38 = vector.broadcast %37 : vector<32x1xbf16> to vector<32x128xbf16>
    %39 = arith.mulf %38, %15 : vector<32x128xbf16>
    %40 = tpu.concatenate %18, %21, %24, %27, %30, %33, %36, %39 in 1 : vector<32x128xbf16>, vector<32x128xbf16>, vector<32x128xbf16>, vector<32x128xbf16>, vector<32x128xbf16>, vector<32x128xbf16>, vector<32x128xbf16>, vector<32x128xbf16> -> vector<32x1024xbf16>
    %c0_10 = arith.constant 0 : index
    %c0_11 = arith.constant 0 : index
    %41 = vector.load %arg5[%c0_10, %c0_11] : memref<32x32xbf16, #tpu.memory_space<vmem>>, vector<32x32xbf16>
    %c0_12 = arith.constant 0 : index
    %c0_13 = arith.constant 0 : index
    %42 = vector.load %arg6[%c0_12, %c0_13] : memref<32x1xf32, #tpu.memory_space<vmem>>, vector<32x1xf32>
    %c0_14 = arith.constant 0 : index
    %c0_15 = arith.constant 0 : index
    %43 = vector.load %arg7[%c0_14, %c0_15] : memref<16x32xbf16, #tpu.memory_space<vmem>>, vector<16x32xbf16>
    %c0_16 = arith.constant 0 : index
    %c0_17 = arith.constant 0 : index
    %44 = vector.load %arg8[%c0_16, %c0_17] : memref<16x1xf32, #tpu.memory_space<vmem>>, vector<16x1xf32>
    %c0_18 = arith.constant 0 : index
    %c0_19 = arith.constant 0 : index
    %45 = vector.load %arg9[%c0_18, %c0_19] : memref<16x1xf32, #tpu.memory_space<vmem>>, vector<16x1xf32>
    %c0_20 = arith.constant 0 : index
    %c0_21 = arith.constant 0 : index
    %46 = vector.load %arg10[%c0_20, %c0_21] : memref<1x1xf32, #tpu.memory_space<vmem>>, vector<1x1xf32>
    %cst_22 = arith.constant dense<0.000000e+00> : vector<32x1024xf32>
    %47 = tpu.matmul %41, %40, %cst_22 {dimension_numbers = #tpu.dot_dimension_numbers<[1], [0], [0], [1], [0, 0, 1, 1], [], []>} : vector<32x32xbf16>, vector<32x1024xbf16>, vector<32x1024xf32> -> vector<32x1024xf32>
    %48 = vector.broadcast %42 : vector<32x1xf32> to vector<32x1024xf32>
    %49 = arith.addf %47, %48 : vector<32x1024xf32>
    %cst_23 = arith.constant 0.000000e+00 : f32
    %50 = vector.broadcast %cst_23 : f32 to vector<32x1024xf32>
    %51 = arith.maximumf %49, %50 : vector<32x1024xf32>
    %52 = arith.truncf %51 : vector<32x1024xf32> to vector<32x1024xbf16>
    %cst_24 = arith.constant dense<0.000000e+00> : vector<16x1024xf32>
    %53 = tpu.matmul %43, %52, %cst_24 {dimension_numbers = #tpu.dot_dimension_numbers<[1], [0], [0], [1], [0, 0, 1, 1], [], []>} : vector<16x32xbf16>, vector<32x1024xbf16>, vector<16x1024xf32> -> vector<16x1024xf32>
    %54 = vector.broadcast %44 : vector<16x1xf32> to vector<16x1024xf32>
    %55 = arith.addf %53, %54 : vector<16x1024xf32>
    %cst_25 = arith.constant 0.000000e+00 : f32
    %56 = vector.broadcast %cst_25 : f32 to vector<16x1024xf32>
    %57 = arith.maximumf %55, %56 : vector<16x1024xf32>
    %58 = vector.broadcast %45 : vector<16x1xf32> to vector<16x1024xf32>
    %59 = arith.mulf %57, %58 : vector<16x1024xf32>
    %cst_26 = arith.constant dense<0.000000e+00> : vector<1024xf32>
    %60 = vector.multi_reduction <add>, %59, %cst_26 [0] : vector<16x1024xf32> to vector<1024xf32>
    %61 = vector.shape_cast %60 : vector<1024xf32> to vector<1x1024xf32>
    %62 = vector.broadcast %46 : vector<1x1xf32> to vector<1x1024xf32>
    %63 = arith.addf %61, %62 : vector<1x1024xf32>
    %64 = vector.extract_strided_slice %63 {offsets = [0, 0], sizes = [1, 128], strides = [1, 1]} : vector<1x1024xf32> to vector<1x128xf32>
    %c0_27 = arith.constant 0 : index
    %c0_28 = arith.constant 0 : index
    %65 = vector.load %arg11[%c0_27, %c0_28] : memref<8x128xf32, #tpu.memory_space<vmem>>, vector<1x128xf32>
    tpu.vector_store %arg11[%c0_27, %c0_28], %64 {strides = array<i32>} : memref<8x128xf32, #tpu.memory_space<vmem>>, vector<1x128xf32>,
    %66 = vector.extract_strided_slice %63 {offsets = [0, 128], sizes = [1, 128], strides = [1, 1]} : vector<1x1024xf32> to vector<1x128xf32>
    %c1 = arith.constant 1 : index
    %c0_29 = arith.constant 0 : index
    %67 = vector.load %arg11[%c1, %c0_29] : memref<8x128xf32, #tpu.memory_space<vmem>>, vector<1x128xf32>
    tpu.vector_store %arg11[%c1, %c0_29], %66 {strides = array<i32>} : memref<8x128xf32, #tpu.memory_space<vmem>>, vector<1x128xf32>,
    %68 = vector.extract_strided_slice %63 {offsets = [0, 256], sizes = [1, 128], strides = [1, 1]} : vector<1x1024xf32> to vector<1x128xf32>
    %c2 = arith.constant 2 : index
    %c0_30 = arith.constant 0 : index
    %69 = vector.load %arg11[%c2, %c0_30] : memref<8x128xf32, #tpu.memory_space<vmem>>, vector<1x128xf32>
    tpu.vector_store %arg11[%c2, %c0_30], %68 {strides = array<i32>} : memref<8x128xf32, #tpu.memory_space<vmem>>, vector<1x128xf32>,
    %70 = vector.extract_strided_slice %63 {offsets = [0, 384], sizes = [1, 128], strides = [1, 1]} : vector<1x1024xf32> to vector<1x128xf32>
    %c3 = arith.constant 3 : index
    %c0_31 = arith.constant 0 : index
    %71 = vector.load %arg11[%c3, %c0_31] : memref<8x128xf32, #tpu.memory_space<vmem>>, vector<1x128xf32>
    tpu.vector_store %arg11[%c3, %c0_31], %70 {strides = array<i32>} : memref<8x128xf32, #tpu.memory_space<vmem>>, vector<1x128xf32>,
    %72 = vector.extract_strided_slice %63 {offsets = [0, 512], sizes = [1, 128], strides = [1, 1]} : vector<1x1024xf32> to vector<1x128xf32>
    %c4 = arith.constant 4 : index
    %c0_32 = arith.constant 0 : index
    %73 = vector.load %arg11[%c4, %c0_32] : memref<8x128xf32, #tpu.memory_space<vmem>>, vector<1x128xf32>
    tpu.vector_store %arg11[%c4, %c0_32], %72 {strides = array<i32>} : memref<8x128xf32, #tpu.memory_space<vmem>>, vector<1x128xf32>,
    %74 = vector.extract_strided_slice %63 {offsets = [0, 640], sizes = [1, 128], strides = [1, 1]} : vector<1x1024xf32> to vector<1x128xf32>
    %c5 = arith.constant 5 : index
    %c0_33 = arith.constant 0 : index
    %75 = vector.load %arg11[%c5, %c0_33] : memref<8x128xf32, #tpu.memory_space<vmem>>, vector<1x128xf32>
    tpu.vector_store %arg11[%c5, %c0_33], %74 {strides = array<i32>} : memref<8x128xf32, #tpu.memory_space<vmem>>, vector<1x128xf32>,
    %76 = vector.extract_strided_slice %63 {offsets = [0, 768], sizes = [1, 128], strides = [1, 1]} : vector<1x1024xf32> to vector<1x128xf32>
    %c6 = arith.constant 6 : index
    %c0_34 = arith.constant 0 : index
    %77 = vector.load %arg11[%c6, %c0_34] : memref<8x128xf32, #tpu.memory_space<vmem>>, vector<1x128xf32>
    tpu.vector_store %arg11[%c6, %c0_34], %76 {strides = array<i32>} : memref<8x128xf32, #tpu.memory_space<vmem>>, vector<1x128xf32>,
    %78 = vector.extract_strided_slice %63 {offsets = [0, 896], sizes = [1, 128], strides = [1, 1]} : vector<1x1024xf32> to vector<1x128xf32>
    %c7 = arith.constant 7 : index
    %c0_35 = arith.constant 0 : index
    %79 = vector.load %arg11[%c7, %c0_35] : memref<8x128xf32, #tpu.memory_space<vmem>>, vector<1x128xf32>
    tpu.vector_store %arg11[%c7, %c0_35], %78 {strides = array<i32>} : memref<8x128xf32, #tpu.memory_space<vmem>>, vector<1x128xf32>,
    return
  }
  func.func @transform_0(%arg0: i32) -> (i32, i32) {
    %c0_i32 = arith.constant 0 : i32
    %c0_i32_0 = arith.constant 0 : i32
    %c0_i32_1 = arith.constant 0 : i32
    return %c0_i32, %c0_i32_0 : i32, i32
  }
  func.func @transform_1(%arg0: i32) -> (i32, i32) {
    %c0_i32 = arith.constant 0 : i32
    %c0_i32_0 = arith.constant 0 : i32
    return %c0_i32, %arg0 : i32, i32
  }
  func.func @transform_2(%arg0: i32) -> (i32, i32) {
    %c0_i32 = arith.constant 0 : i32
    %c0_i32_0 = arith.constant 0 : i32
    %c0_i32_1 = arith.constant 0 : i32
    return %c0_i32, %c0_i32_0 : i32, i32
  }
  func.func @transform_3(%arg0: i32) -> (i32, i32) {
    %c0_i32 = arith.constant 0 : i32
    %c0_i32_0 = arith.constant 0 : i32
    %c0_i32_1 = arith.constant 0 : i32
    return %c0_i32, %c0_i32_0 : i32, i32
  }
  func.func @transform_4(%arg0: i32) -> (i32, i32) {
    %c0_i32 = arith.constant 0 : i32
    %c0_i32_0 = arith.constant 0 : i32
    %c0_i32_1 = arith.constant 0 : i32
    return %c0_i32, %c0_i32_0 : i32, i32
  }
  func.func @transform_5(%arg0: i32) -> (i32, i32) {
    %c0_i32 = arith.constant 0 : i32
    %c0_i32_0 = arith.constant 0 : i32
    %c0_i32_1 = arith.constant 0 : i32
    return %c0_i32, %c0_i32_0 : i32, i32
  }
  func.func @transform_6(%arg0: i32) -> (i32, i32) {
    %c0_i32 = arith.constant 0 : i32
    %c0_i32_0 = arith.constant 0 : i32
    %c0_i32_1 = arith.constant 0 : i32
    return %c0_i32, %c0_i32_0 : i32, i32
  }
  func.func @transform_7(%arg0: i32) -> (i32, i32) {
    %c0_i32 = arith.constant 0 : i32
    %c0_i32_0 = arith.constant 0 : i32
    %c0_i32_1 = arith.constant 0 : i32
    return %c0_i32, %c0_i32_0 : i32, i32
  }
  func.func @transform_8(%arg0: i32) -> (i32, i32) {
    %c0_i32 = arith.constant 0 : i32
    %c0_i32_0 = arith.constant 0 : i32
    %c0_i32_1 = arith.constant 0 : i32
    return %c0_i32, %c0_i32_0 : i32, i32
  }
  func.func @transform_9(%arg0: i32) -> (i32, i32) {
    %c0_i32 = arith.constant 0 : i32
    %c0_i32_0 = arith.constant 0 : i32
    %c0_i32_1 = arith.constant 0 : i32
    return %c0_i32, %c0_i32_0 : i32, i32
  }
  func.func @transform_10(%arg0: i32) -> (i32, i32) {
    %c0_i32 = arith.constant 0 : i32
    %c0_i32_0 = arith.constant 0 : i32
    return %c0_i32, %arg0 : i32, i32
  }
}

</mosaic_0001>

<llo_original>
// kernel: _pair_step.1
$region0: #{_pair_step.1}
  #allocation0 [shape = 'u32[]', space=smem, size = 0x4, offset = 0x4, fixed_abs, tag = 'smem constant byte address 0x4 - core index']
  #allocation1 [shape = 'u32[144,128]{1,0:T(1,128)}', space=vmem, size = 0x12000, scoped, tag = 'internal scratch']
  #allocation2 [shape = 'f32[1,1]{1,0:T(1,128)S(1)}', space=vmem, size = 0x200, scoped, tag = 'scoped memory for _pair_step.1']
  %s0 = inlined_call_operand.vmem [shape: bf16[64,8], index: 0, kind: input, shape index: {}]
  %s1 = inlined_call_operand.vmem [shape: bf16[64,128], index: 1, kind: input, shape index: {}]
  %s2 = inlined_call_operand.vmem [shape: bf16[32,64], index: 2, kind: input, shape index: {}]
  %s3 = inlined_call_operand.vmem [shape: f32[32,1], index: 3, kind: input, shape index: {}]
  %s4 = inlined_call_operand.vmem [shape: bf16[32,32], index: 4, kind: input, shape index: {}]
  %s5 = inlined_call_operand.vmem [shape: f32[32,1], index: 5, kind: input, shape index: {}]
  %s6 = inlined_call_operand.vmem [shape: bf16[16,32], index: 6, kind: input, shape index: {}]
  %s7 = inlined_call_operand.vmem [shape: f32[16,1], index: 7, kind: input, shape index: {}]
  %s8 = inlined_call_operand.vmem [shape: f32[16,1], index: 8, kind: input, shape index: {}]
  %s9 = inlined_call_operand.<no memory space> [shape: f32[1,1], index: 9, kind: input, shape index: {}]
  %s10 = inlined_call_operand.hbm [shape: f32[8,128], index: 10, kind: output, shape index: {}]
  %s11 = sld [smem:[#allocation0]]
  $region50: #{_pair_step.1} parent=0
    _
  %s13 = ssub.s32 1, %s11
  %s14 = scalar_select 0, %s13, %s11
  %v15 = vstv %s9
  %16 = vst [vmem:[#allocation2] sm:$0x1] %v15
  $region1: #{_pair_step.1} parent=0
    #allocation3 [shape = 'u8[4096]{0}', space=vmem, size = 0x1000, scoped, tag = 'output window, operand 0, single buffered']
    #allocation4 [shape = 's32[1]{0}', space=sflag, size = 0x4, scoped, tag = 'scoped memory for _pair_step.1']
    %17 = vsyncpa [#allocation4], 0
    // Predicated region
    $region2: #{_pair_step.1} parent=1 // pred_check
      _
    $region3: #{_pair_step.1} parent=1 // pred_check_branch
      %19 = sbr.rel (0) target = $region5
    $region4: #{_pair_step.1} parent=1 // pred_region
      _
    $region5: #{_pair_step.1} parent=1 // pred_fallthru
      _
    // Predicated region
    $region6: #{_pair_step.1} parent=1 // pred_check
      _
    $region7: #{_pair_step.1} parent=1 // pred_check_branch
      %21 = sbr.rel (0) target = $region9
    $region8: #{_pair_step.1} parent=1 // pred_region
      _
    $region9: #{_pair_step.1} parent=1 // pred_fallthru
      _
    // Predicated region
    $region10: #{_pair_step.1} parent=1 // pred_check
      _
    $region11: #{_pair_step.1} parent=1 // pred_check_branch
      %23 = sbr.rel (0) target = $region13
    $region12: #{_pair_step.1} parent=1 // pred_region
      _
    $region13: #{_pair_step.1} parent=1 // pred_fallthru
      _
    // Predicated region
    $region14: #{_pair_step.1} parent=1 // pred_check
      _
    $region15: #{_pair_step.1} parent=1 // pred_check_branch
      %25 = sbr.rel (0) target = $region17
    $region16: #{_pair_step.1} parent=1 // pred_region
      _
    $region17: #{_pair_step.1} parent=1 // pred_fallthru
      _
    // Predicated region
    $region18: #{_pair_step.1} parent=1 // pred_check
      _
    $region19: #{_pair_step.1} parent=1 // pred_check_branch
      %27 = sbr.rel (0) target = $region21
    $region20: #{_pair_step.1} parent=1 // pred_region
      _
    $region21: #{_pair_step.1} parent=1 // pred_fallthru
      _
    // Predicated region
    $region22: #{_pair_step.1} parent=1 // pred_check
      _
    $region23: #{_pair_step.1} parent=1 // pred_check_branch
      %29 = sbr.rel (0) target = $region25
    $region24: #{_pair_step.1} parent=1 // pred_region
      _
    $region25: #{_pair_step.1} parent=1 // pred_fallthru
      _
    // Predicated region
    $region26: #{_pair_step.1} parent=1 // pred_check
      _
    $region27: #{_pair_step.1} parent=1 // pred_check_branch
      %31 = sbr.rel (0) target = $region29
    $region28: #{_pair_step.1} parent=1 // pred_region
      _
    $region29: #{_pair_step.1} parent=1 // pred_fallthru
      _
    // Predicated region
    $region30: #{_pair_step.1} parent=1 // pred_check
      _
    $region31: #{_pair_step.1} parent=1 // pred_check_branch
      %33 = sbr.rel (0) target = $region33
    $region32: #{_pair_step.1} parent=1 // pred_region
      _
    $region33: #{_pair_step.1} parent=1 // pred_fallthru
      _
    // Predicated region
    $region34: #{_pair_step.1} parent=1 // pred_check
      _
    $region35: #{_pair_step.1} parent=1 // pred_check_branch
      %35 = sbr.rel (0) target = $region37
    $region36: #{_pair_step.1} parent=1 // pred_region
      _
    $region37: #{_pair_step.1} parent=1 // pred_fallthru
      _
    // Predicated region
    $region38: #{_pair_step.1} parent=1 // pred_check
      _
    $region39: #{_pair_step.1} parent=1 // pred_check_branch
      %37 = sbr.rel (0) target = $region41
    $region40: #{_pair_step.1} parent=1 // pred_region
      _
    $region41: #{_pair_step.1} parent=1 // pred_fallthru
      _
    %v39 = vld [vmem:[%s2] sm:$0xf]
    %v40 = vld [vmem:[%s2 + $0x4] sm:$0xf]
    %v41 = vld [vmem:[%s2 + $0x8] sm:$0xf]
    %v42 = vld [vmem:[%s2 + $0xc] sm:$0xf]
    %v43 = vld [vmem:[%s3] sm:$0xff]
    %v44 = vld [vmem:[%s3 + $0x8] sm:$0xff]
    %v45 = vld [vmem:[%s3 + $0x10] sm:$0xff]
    %v46 = vld [vmem:[%s3 + $0x18] sm:$0xff]
    %v47 = vld [vmem:[%s0] sm:$0xf]
    %v48 = vld [vmem:[%s0 + $0x4] sm:$0xf]
    %v49 = vld [vmem:[%s0 + $0x8] sm:$0xf]
    %v50 = vld [vmem:[%s0 + $0xc] sm:$0xf]
    %v51 = vld [vmem:[%s0 + $0x10] sm:$0xf]
    %v52 = vld [vmem:[%s0 + $0x14] sm:$0xf]
    %v53 = vld [vmem:[%s0 + $0x18] sm:$0xf]
    %v54 = vld [vmem:[%s0 + $0x1c] sm:$0xf]
    %56 = vset.pattern.permute.xlu0 0
    %57 = vperm.xlu0 %56, %v43
    %v58 = vpop.permute.xlu0 %57
    %61 = vset.pattern.permute.xlu0 0
    %62 = vperm.xlu0 %61, %v44
    %v63 = vpop.permute.xlu0 %62
    %66 = vset.pattern.permute.xlu0 0
    %67 = vperm.xlu0 %66, %v45
    %v68 = vpop.permute.xlu0 %67
    %71 = vset.pattern.permute.xlu0 0
    %72 = vperm.xlu0 %71, %v46
    %v73 = vpop.permute.xlu0 %72
    %v79 = vunpack.c.l.b16 %v39
    %v80 = vunpack.c.l.b16 %v40
    %v81 = vunpack.c.l.b16 %v41
    %v82 = vunpack.c.l.b16 %v42
    %v83 = vpack.c.b16 %v80, %v79
    %v84 = vpack.c.b16 %v82, %v81
    %v93 = vunpack.c.l.b16 %v47
    %v94 = vunpack.c.l.b16 %v48
    %v95 = vunpack.c.l.b16 %v49
    %v96 = vunpack.c.l.b16 %v50
    %v97 = vunpack.c.l.b16 %v51
    %v98 = vunpack.c.l.b16 %v52
    %v99 = vunpack.c.l.b16 %v53
    %v100 = vunpack.c.l.b16 %v54
    %v101 = vpack.c.b16 %v94, %v93
    %v102 = vpack.c.b16 %v96, %v95
    %v103 = vpack.c.b16 %v98, %v97
    %v104 = vpack.c.b16 %v100, %v99
    %vm109 = vcmask 523264
    %v111 = vsel %vm109, %v83, 0
    %v114 = vsel %vm109, %v84, 0
    %116 = vmatprep.subr.bf16.mxu0 0
    %117 = vmatpush1.bf16.msra.mxu0 0
    %118 = vmatprep.subr.bf16.mxu0 0
    %119 = vmatpush1.bf16.msra.mxu0 0
    %120 = vmatprep.subr.bf16.mxu0 0
    %121 = vmatpush1.bf16.msra.mxu0 0
    %122 = vmatprep.subr.bf16.mxu0 0
    %123 = vmatpush1.bf16.msra.mxu0 0
    %124 = vmatprep.subr.bf16.mxu0 0
    %125 = vmatpush1.bf16.msra.mxu0 %v104
    %126 = vmatprep.subr.bf16.mxu0 0
    %127 = vmatpush1.bf16.msra.mxu0 %v103
    %128 = vmatprep.subr.bf16.mxu0 0
    %129 = vmatpush1.bf16.msra.mxu0 %v102
    %130 = vmatprep.subr.bf16.mxu0 0
    %131 = vmatpush1.bf16.msra.mxu0 %v101
    %132 = vmatprep.subr.bf16.mxu0 0
    %133 = vmatpush2.bf16.msra.mxu0 0
    %134 = vmatprep.subr.bf16.mxu0 0
    %135 = vmatpush2.bf16.msra.mxu0 0
    %136 = vmatprep.subr.bf16.mxu0 0
    %137 = vmatpush2.bf16.msra.mxu0 0
    %138 = vmatprep.subr.bf16.mxu0 0
    %139 = vmatpush2.bf16.msra.mxu0 0
    %140 = vmatprep.subr.bf16.mxu0 0
    %141 = vmatpush2.bf16.msra.mxu0 0
    %142 = vmatprep.subr.bf16.mxu0 0
    %143 = vmatpush2.bf16.msra.mxu0 0
    %144 = vmatprep.subr.bf16.mxu0 0
    %145 = vmatpush2.bf16.msra.mxu0 0
    %146 = vmatprep.subr.bf16.mxu0 0
    %147 = vmatpush2.bf16.msra.mxu0 0
    %148 = vmatprep.mubr.bf16.mxu0 0
    %149 = vmatmul.mubr.bf16.gmra.mxu0 %v111
    %v150 = vpop.f32.mrf.mxu0
    %v151 = vadd.f32 %v58, %v150
    %v152 = vpop.f32.mrf.mxu0
    %v153 = vpop.f32.mrf.mxu0
    %v154 = vadd.f32 %v63, %v153
    %v155 = vpop.f32.mrf.mxu0
    %156 = vmatprep.mubr.bf16.mxu0 0
    %157 = vmatmul.mubr.bf16.gmra.mxu0 %v114
    %v158 = vpop.f32.mrf.mxu0
    %v159 = vadd.f32 %v68, %v158
    %v160 = vpop.f32.mrf.mxu0
    %v161 = vpop.f32.mrf.mxu0
    %v162 = vadd.f32 %v73, %v161
    %v163 = vpop.f32.mrf.mxu0
    %164 = vdwg.mxu0
    %v165 = vmax.f32 %v151, 0.0
    %v166 = vmax.f32 %v154, 0.0
    %v167 = vmax.f32 %v159, 0.0
    %v168 = vmax.f32 %v162, 0.0
    %v169 = vpack.c.bf16 %v166, %v165
    %v170 = vpack.c.bf16 %v168, %v167
    %v171 = vld [vmem:[%s1] sm:$0xf]
    %v172 = vld [vmem:[%s1 + $0x4] sm:$0xf]
    %v173 = vld [vmem:[%s1 + $0x8] sm:$0xf]
    %v174 = vld [vmem:[%s1 + $0xc] sm:$0xf]
    %v175 = vld [vmem:[%s1 + $0x10] sm:$0xf]
    %v176 = vld [vmem:[%s1 + $0x14] sm:$0xf]
    %v177 = vld [vmem:[%s1 + $0x18] sm:$0xf]
    %v178 = vld [vmem:[%s1 + $0x1c] sm:$0xf]
    %v187 = vunpack.c.l.b16 %v171
    %v188 = vunpack.c.l.b16 %v172
    %v189 = vunpack.c.l.b16 %v173
    %v190 = vunpack.c.l.b16 %v174
    %v191 = vunpack.c.l.b16 %v175
    %v192 = vunpack.c.l.b16 %v176
    %v193 = vunpack.c.l.b16 %v177
    %v194 = vunpack.c.l.b16 %v178
    %v195 = vpack.c.b16 %v188, %v187
    %v196 = vpack.c.b16 %v190, %v189
    %v197 = vpack.c.b16 %v192, %v191
    %v198 = vpack.c.b16 %v194, %v193
    %203 = vmatprep.subr.bf16.mxu0 0
    %204 = vmatpush1.bf16.msra.mxu0 0
    %205 = vmatprep.subr.bf16.mxu0 0
    %206 = vmatpush1.bf16.msra.mxu0 0
    %207 = vmatprep.subr.bf16.mxu0 0
    %208 = vmatpush1.bf16.msra.mxu0 0
    %209 = vmatprep.subr.bf16.mxu0 0
    %210 = vmatpush1.bf16.msra.mxu0 0
    %211 = vmatprep.subr.bf16.mxu0 0
    %212 = vmatpush1.bf16.msra.mxu0 %v198
    %213 = vmatprep.subr.bf16.mxu0 0
    %214 = vmatpush1.bf16.msra.mxu0 %v197
    %215 = vmatprep.subr.bf16.mxu0 0
    %216 = vmatpush1.bf16.msra.mxu0 %v196
    %217 = vmatprep.subr.bf16.mxu0 0
    %218 = vmatpush1.bf16.msra.mxu0 %v195
    %219 = vmatprep.subr.bf16.mxu0 0
    %220 = vmatpush2.bf16.msra.mxu0 0
    %221 = vmatprep.subr.bf16.mxu0 0
    %222 = vmatpush2.bf16.msra.mxu0 0
    %223 = vmatprep.subr.bf16.mxu0 0
    %224 = vmatpush2.bf16.msra.mxu0 0
    %225 = vmatprep.subr.bf16.mxu0 0
    %226 = vmatpush2.bf16.msra.mxu0 0
    %227 = vmatprep.subr.bf16.mxu0 0
    %228 = vmatpush2.bf16.msra.mxu0 0
    %229 = vmatprep.subr.bf16.mxu0 0
    %230 = vmatpush2.bf16.msra.mxu0 0
    %231 = vmatprep.subr.bf16.mxu0 0
    %232 = vmatpush2.bf16.msra.mxu0 0
    %233 = vmatprep.subr.bf16.mxu0 0
    %234 = vmatpush2.bf16.msra.mxu0 0
    %235 = vmatprep.mubr.bf16.mxu0 0
    %236 = vmatmul.mubr.bf16.gmra.mxu0 %v111
    %v237 = vpop.f32.mrf.mxu0
    %v238 = vadd.f32 %v58, %v237
    %v239 = vpop.f32.mrf.mxu0
    %v240 = vpop.f32.mrf.mxu0
    %v241 = vadd.f32 %v63, %v240
    %v242 = vpop.f32.mrf.mxu0
    %243 = vmatprep.mubr.bf16.mxu0 0
    %244 = vmatmul.mubr.bf16.gmra.mxu0 %v114
    %v245 = vpop.f32.mrf.mxu0
    %v246 = vadd.f32 %v68, %v245
    %v247 = vpop.f32.mrf.mxu0
    %v248 = vpop.f32.mrf.mxu0
    %v249 = vadd.f32 %v73, %v248
    %v250 = vpop.f32.mrf.mxu0
    %251 = vdwg.mxu0
    %v252 = vmax.f32 %v238, 0.0
    %v253 = vmax.f32 %v241, 0.0
    %v254 = vmax.f32 %v246, 0.0
    %v255 = vmax.f32 %v249, 0.0
    %v256 = vpack.c.bf16 %v253, %v252
    %v257 = vpack.c.bf16 %v255, %v254
    %259 = vset.pattern.permute.xlu0 0
    %260 = vperm.xlu0 %259, %v169
    %v261 = vpop.permute.xlu0 %260
    %264 = vset.pattern.permute.xlu0 0
    %265 = vperm.xlu0 %264, %v170
    %v266 = vpop.permute.xlu0 %265
    %v268 = vmul.bf16 %v261, %v256
    %v269 = vmul.bf16 %v266, %v257
    %270 = vset.pattern.permute.xlu0 1
    %271 = vperm.xlu0 %270, %v169
    %v272 = vpop.permute.xlu0 %271
    %274 = vset.pattern.permute.xlu0 1
    %275 = vperm.xlu0 %274, %v170
    %v276 = vpop.permute.xlu0 %275
    %v278 = vmul.bf16 %v272, %v256
    %v279 = vmul.bf16 %v276, %v257
    %280 = vset.pattern.permute.xlu0 2
    %281 = vperm.xlu0 %280, %v169
    %v282 = vpop.permute.xlu0 %281
    %284 = vset.pattern.permute.xlu0 2
    %285 = vperm.xlu0 %284, %v170
    %v286 = vpop.permute.xlu0 %285
    %v288 = vmul.bf16 %v282, %v256
    %v289 = vmul.bf16 %v286, %v257
    %290 = vset.pattern.permute.xlu0 3
    %291 = vperm.xlu0 %290, %v169
    %v292 = vpop.permute.xlu0 %291
    %294 = vset.pattern.permute.xlu0 3
    %295 = vperm.xlu0 %294, %v170
    %v296 = vpop.permute.xlu0 %295
    %v298 = vmul.bf16 %v292, %v256
    %v299 = vmul.bf16 %v296, %v257
    %300 = vset.pattern.permute.xlu0 4
    %301 = vperm.xlu0 %300, %v169
    %v302 = vpop.permute.xlu0 %301
    %304 = vset.pattern.permute.xlu0 4
    %305 = vperm.xlu0 %304, %v170
    %v306 = vpop.permute.xlu0 %305
    %v308 = vmul.bf16 %v302, %v256
    %v309 = vmul.bf16 %v306, %v257
    %310 = vset.pattern.permute.xlu0 5
    %311 = vperm.xlu0 %310, %v169
    %v312 = vpop.permute.xlu0 %311
    %314 = vset.pattern.permute.xlu0 5
    %315 = vperm.xlu0 %314, %v170
    %v316 = vpop.permute.xlu0 %315
    %v318 = vmul.bf16 %v312, %v256
    %v319 = vmul.bf16 %v316, %v257
    %320 = vset.pattern.permute.xlu0 6
    %321 = vperm.xlu0 %320, %v169
    %v322 = vpop.permute.xlu0 %321
    %324 = vset.pattern.permute.xlu0 6
    %325 = vperm.xlu0 %324, %v170
    %v326 = vpop.permute.xlu0 %325
    %v328 = vmul.bf16 %v322, %v256
    %v329 = vmul.bf16 %v326, %v257
    %330 = vset.pattern.permute.xlu0 7
    %331 = vperm.xlu0 %330, %v169
    %v332 = vpop.permute.xlu0 %331
    %334 = vset.pattern.permute.xlu0 7
    %335 = vperm.xlu0 %334, %v170
    %v336 = vpop.permute.xlu0 %335
    %v338 = vmul.bf16 %v332, %v256
    %v339 = vmul.bf16 %v336, %v257
    %v340 = vld [vmem:[%s4] sm:$0xf]
    %v341 = vld [vmem:[%s4 + $0x4] sm:$0xf]
    %v342 = vld [vmem:[%s4 + $0x8] sm:$0xf]
    %v343 = vld [vmem:[%s4 + $0xc] sm:$0xf]
    %v344 = vld [vmem:[%s5] sm:$0xff]
    %v345 = vld [vmem:[%s5 + $0x8] sm:$0xff]
    %v346 = vld [vmem:[%s5 + $0x10] sm:$0xff]
    %v347 = vld [vmem:[%s5 + $0x18] sm:$0xff]
    %v348 = vld [vmem:[%s6] sm:$0xf]
    %v349 = vld [vmem:[%s6 + $0x4] sm:$0xf]
    %v350 = vld [vmem:[%s7] sm:$0xff]
    %v351 = vld [vmem:[%s7 + $0x8] sm:$0xff]
    %v352 = vld [vmem:[%s8] sm:$0xff]
    %v353 = vld [vmem:[%s8 + $0x8] sm:$0xff]
    %v354 = vld [vmem:[#allocation2] sm:$0x1]
    %356 = vset.pattern.permute.xlu0 0
    %357 = vperm.xlu0 %356, %v344
    %v358 = vpop.permute.xlu0 %357
    %361 = vset.pattern.permute.xlu0 0
    %362 = vperm.xlu0 %361, %v345
    %v363 = vpop.permute.xlu0 %362
    %366 = vset.pattern.permute.xlu0 0
    %367 = vperm.xlu0 %366, %v346
    %v368 = vpop.permute.xlu0 %367
    %371 = vset.pattern.permute.xlu0 0
    %372 = vperm.xlu0 %371, %v347
    %v373 = vpop.permute.xlu0 %372
    %v379 = vunpack.c.l.b16 %v340
    %v380 = vunpack.c.l.b16 %v341
    %v381 = vunpack.c.l.b16 %v342
    %v382 = vunpack.c.l.b16 %v343
    %v383 = vpack.c.b16 %v380, %v379
    %v384 = vpack.c.b16 %v382, %v381
    %vm385 = vcmask 261120
    %v387 = vsel %vm385, %v383, 0
    %v390 = vsel %vm385, %v384, 0
    %392 = vmatprep.subr.bf16.mxu0 0
    %393 = vmatpush1.bf16.msra.mxu0 0
    %394 = vmatprep.subr.bf16.mxu0 0
    %395 = vmatpush1.bf16.msra.mxu0 0
    %396 = vmatprep.subr.bf16.mxu0 0
    %397 = vmatpush1.bf16.msra.mxu0 0
    %398 = vmatprep.subr.bf16.mxu0 0
    %399 = vmatpush1.bf16.msra.mxu0 0
    %400 = vmatprep.subr.bf16.mxu0 0
    %401 = vmatpush1.bf16.msra.mxu0 0
    %402 = vmatprep.subr.bf16.mxu0 0
    %403 = vmatpush1.bf16.msra.mxu0 0
    %404 = vmatprep.subr.bf16.mxu0 %v279
    %405 = vmatpush1.bf16.msra.mxu0 %v269
    %406 = vmatprep.subr.bf16.mxu0 %v278
    %407 = vmatpush1.bf16.msra.mxu0 %v268
    %408 = vmatprep.subr.bf16.mxu0 0
    %409 = vmatpush2.bf16.msra.mxu0 0
    %410 = vmatprep.subr.bf16.mxu0 0
    %411 = vmatpush2.bf16.msra.mxu0 0
    %412 = vmatprep.subr.bf16.mxu0 0
    %413 = vmatpush2.bf16.msra.mxu0 0
    %414 = vmatprep.subr.bf16.mxu0 0
    %415 = vmatpush2.bf16.msra.mxu0 0
    %416 = vmatprep.subr.bf16.mxu0 0
    %417 = vmatpush2.bf16.msra.mxu0 0
    %418 = vmatprep.subr.bf16.mxu0 0
    %419 = vmatpush2.bf16.msra.mxu0 0
    %420 = vmatprep.subr.bf16.mxu0 0
    %421 = vmatpush2.bf16.msra.mxu0 0
    %422 = vmatprep.subr.bf16.mxu0 0
    %423 = vmatpush2.bf16.msra.mxu0 0
    %424 = vmatprep.mubr.bf16.mxu0 0
    %425 = vmatmul.mubr.bf16.gmra.mxu0 %v387
    %v426 = vpop.f32.mrf.mxu0
    %v427 = vadd.f32 %v358, %v426
    %v428 = vpop.f32.mrf.mxu0
    %v429 = vadd.f32 %v358, %v428
    %v430 = vpop.f32.mrf.mxu0
    %v431 = vadd.f32 %v363, %v430
    %v432 = vpop.f32.mrf.mxu0
    %v433 = vadd.f32 %v363, %v432
    %434 = vmatprep.mubr.bf16.mxu0 0
    %435 = vmatmul.mubr.bf16.gmra.mxu0 %v390
    %v436 = vpop.f32.mrf.mxu0
    %v437 = vadd.f32 %v368, %v436
    %v438 = vpop.f32.mrf.mxu0
    %v439 = vadd.f32 %v368, %v438
    %v440 = vpop.f32.mrf.mxu0
    %v441 = vadd.f32 %v373, %v440
    %v442 = vpop.f32.mrf.mxu0
    %v443 = vadd.f32 %v373, %v442
    %444 = vdwg.mxu0
    %445 = vmatprep.subr.bf16.mxu0 0
    %446 = vmatpush1.bf16.msra.mxu0 0
    %447 = vmatprep.subr.bf16.mxu0 0
    %448 = vmatpush1.bf16.msra.mxu0 0
    %449 = vmatprep.subr.bf16.mxu0 0
    %450 = vmatpush1.bf16.msra.mxu0 0
    %451 = vmatprep.subr.bf16.mxu0 0
    %452 = vmatpush1.bf16.msra.mxu0 0
    %453 = vmatprep.subr.bf16.mxu0 0
    %454 = vmatpush1.bf16.msra.mxu0 0
    %455 = vmatprep.subr.bf16.mxu0 0
    %456 = vmatpush1.bf16.msra.mxu0 0
    %457 = vmatprep.subr.bf16.mxu0 %v299
    %458 = vmatpush1.bf16.msra.mxu0 %v289
    %459 = vmatprep.subr.bf16.mxu0 %v298
    %460 = vmatpush1.bf16.msra.mxu0 %v288
    %461 = vmatprep.subr.bf16.mxu0 0
    %462 = vmatpush2.bf16.msra.mxu0 0
    %463 = vmatprep.subr.bf16.mxu0 0
    %464 = vmatpush2.bf16.msra.mxu0 0
    %465 = vmatprep.subr.bf16.mxu0 0
    %466 = vmatpush2.bf16.msra.mxu0 0
    %467 = vmatprep.subr.bf16.mxu0 0
    %468 = vmatpush2.bf16.msra.mxu0 0
    %469 = vmatprep.subr.bf16.mxu0 0
    %470 = vmatpush2.bf16.msra.mxu0 0
    %471 = vmatprep.subr.bf16.mxu0 0
    %472 = vmatpush2.bf16.msra.mxu0 0
    %473 = vmatprep.subr.bf16.mxu0 0
    %474 = vmatpush2.bf16.msra.mxu0 0
    %475 = vmatprep.subr.bf16.mxu0 0
    %476 = vmatpush2.bf16.msra.mxu0 0
    %477 = vmatprep.mubr.bf16.mxu0 0
    %478 = vmatmul.mubr.bf16.gmra.mxu0 %v387
    %v479 = vpop.f32.mrf.mxu0
    %v480 = vadd.f32 %v358, %v479
    %v481 = vpop.f32.mrf.mxu0
    %v482 = vadd.f32 %v358, %v481
    %v483 = vpop.f32.mrf.mxu0
    %v484 = vadd.f32 %v363, %v483
    %v485 = vpop.f32.mrf.mxu0
    %v486 = vadd.f32 %v363, %v485
    %487 = vmatprep.mubr.bf16.mxu0 0
    %488 = vmatmul.mubr.bf16.gmra.mxu0 %v390
    %v489 = vpop.f32.mrf.mxu0
    %v490 = vadd.f32 %v368, %v489
    %v491 = vpop.f32.mrf.mxu0
    %v492 = vadd.f32 %v368, %v491
    %v493 = vpop.f32.mrf.mxu0
    %v494 = vadd.f32 %v373, %v493
    %v495 = vpop.f32.mrf.mxu0
    %v496 = vadd.f32 %v373, %v495
    %497 = vdwg.mxu0
    %498 = vmatprep.subr.bf16.mxu0 0
    %499 = vmatpush1.bf16.msra.mxu0 0
    %500 = vmatprep.subr.bf16.mxu0 0
    %501 = vmatpush1.bf16.msra.mxu0 0
    %502 = vmatprep.subr.bf16.mxu0 0
    %503 = vmatpush1.bf16.msra.mxu0 0
    %504 = vmatprep.subr.bf16.mxu0 0
    %505 = vmatpush1.bf16.msra.mxu0 0
    %506 = vmatprep.subr.bf16.mxu0 0
    %507 = vmatpush1.bf16.msra.mxu0 0
    %508 = vmatprep.subr.bf16.mxu0 0
    %509 = vmatpush1.bf16.msra.mxu0 0
    %510 = vmatprep.subr.bf16.mxu0 %v319
    %511 = vmatpush1.bf16.msra.mxu0 %v309
    %512 = vmatprep.subr.bf16.mxu0 %v318
    %513 = vmatpush1.bf16.msra.mxu0 %v308
    %514 = vmatprep.subr.bf16.mxu0 0
    %515 = vmatpush2.bf16.msra.mxu0 0
    %516 = vmatprep.subr.bf16.mxu0 0
    %517 = vmatpush2.bf16.msra.mxu0 0
    %518 = vmatprep.subr.bf16.mxu0 0
    %519 = vmatpush2.bf16.msra.mxu0 0
    %520 = vmatprep.subr.bf16.mxu0 0
    %521 = vmatpush2.bf16.msra.mxu0 0
    %522 = vmatprep.subr.bf16.mxu0 0
    %523 = vmatpush2.bf16.msra.mxu0 0
    %524 = vmatprep.subr.bf16.mxu0 0
    %525 = vmatpush2.bf16.msra.mxu0 0
    %526 = vmatprep.subr.bf16.mxu0 0
    %527 = vmatpush2.bf16.msra.mxu0 0
    %528 = vmatprep.subr.bf16.mxu0 0
    %529 = vmatpush2.bf16.msra.mxu0 0
    %530 = vmatprep.mubr.bf16.mxu0 0
    %531 = vmatmul.mubr.bf16.gmra.mxu0 %v387
    %v532 = vpop.f32.mrf.mxu0
    %v533 = vadd.f32 %v358, %v532
    %v534 = vpop.f32.mrf.mxu0
    %v535 = vadd.f32 %v358, %v534
    %v536 = vpop.f32.mrf.mxu0
    %v537 = vadd.f32 %v363, %v536
    %v538 = vpop.f32.mrf.mxu0
    %v539 = vadd.f32 %v363, %v538
    %540 = vmatprep.mubr.bf16.mxu0 0
    %541 = vmatmul.mubr.bf16.gmra.mxu0 %v390
    %v542 = vpop.f32.mrf.mxu0
    %v543 = vadd.f32 %v368, %v542
    %v544 = vpop.f32.mrf.mxu0
    %v545 = vadd.f32 %v368, %v544
    %v546 = vpop.f32.mrf.mxu0
    %v547 = vadd.f32 %v373, %v546
    %v548 = vpop.f32.mrf.mxu0
    %v549 = vadd.f32 %v373, %v548
    %550 = vdwg.mxu0
    %551 = vmatprep.subr.bf16.mxu0 0
    %552 = vmatpush1.bf16.msra.mxu0 0
    %553 = vmatprep.subr.bf16.mxu0 0
    %554 = vmatpush1.bf16.msra.mxu0 0
    %555 = vmatprep.subr.bf16.mxu0 0
    %556 = vmatpush1.bf16.msra.mxu0 0
    %557 = vmatprep.subr.bf16.mxu0 0
    %558 = vmatpush1.bf16.msra.mxu0 0
    %559 = vmatprep.subr.bf16.mxu0 0
    %560 = vmatpush1.bf16.msra.mxu0 0
    %561 = vmatprep.subr.bf16.mxu0 0
    %562 = vmatpush1.bf16.msra.mxu0 0
    %563 = vmatprep.subr.bf16.mxu0 %v339
    %564 = vmatpush1.bf16.msra.mxu0 %v329
    %565 = vmatprep.subr.bf16.mxu0 %v338
    %566 = vmatpush1.bf16.msra.mxu0 %v328
    %567 = vmatprep.subr.bf16.mxu0 0
    %568 = vmatpush2.bf16.msra.mxu0 0
    %569 = vmatprep.subr.bf16.mxu0 0
    %570 = vmatpush2.bf16.msra.mxu0 0
    %571 = vmatprep.subr.bf16.mxu0 0
    %572 = vmatpush2.bf16.msra.mxu0 0
    %573 = vmatprep.subr.bf16.mxu0 0
    %574 = vmatpush2.bf16.msra.mxu0 0
    %575 = vmatprep.subr.bf16.mxu0 0
    %576 = vmatpush2.bf16.msra.mxu0 0
    %577 = vmatprep.subr.bf16.mxu0 0
    %578 = vmatpush2.bf16.msra.mxu0 0
    %579 = vmatprep.subr.bf16.mxu0 0
    %580 = vmatpush2.bf16.msra.mxu0 0
    %581 = vmatprep.subr.bf16.mxu0 0
    %582 = vmatpush2.bf16.msra.mxu0 0
    %583 = vmatprep.mubr.bf16.mxu0 0
    %584 = vmatmul.mubr.bf16.gmra.mxu0 %v387
    %v585 = vpop.f32.mrf.mxu0
    %v586 = vadd.f32 %v358, %v585
    %v587 = vpop.f32.mrf.mxu0
    %v588 = vadd.f32 %v358, %v587
    %v589 = vpop.f32.mrf.mxu0
    %v590 = vadd.f32 %v363, %v589
    %v591 = vpop.f32.mrf.mxu0
    %v592 = vadd.f32 %v363, %v591
    %593 = vmatprep.mubr.bf16.mxu0 0
    %594 = vmatmul.mubr.bf16.gmra.mxu0 %v390
    %v595 = vpop.f32.mrf.mxu0
    %v596 = vadd.f32 %v368, %v595
    %v597 = vpop.f32.mrf.mxu0
    %v598 = vadd.f32 %v368, %v597
    %v599 = vpop.f32.mrf.mxu0
    %v600 = vadd.f32 %v373, %v599
    %v601 = vpop.f32.mrf.mxu0
    %v602 = vadd.f32 %v373, %v601
    %603 = vdwg.mxu0
    %v604 = vmax.f32 %v427, 0.0
    %v605 = vmax.f32 %v429, 0.0
    %v606 = vmax.f32 %v480, 0.0
    %v607 = vmax.f32 %v482, 0.0
    %v608 = vmax.f32 %v533, 0.0
    %v609 = vmax.f32 %v535, 0.0
    %v610 = vmax.f32 %v586, 0.0
    %v611 = vmax.f32 %v588, 0.0
    %v612 = vmax.f32 %v431, 0.0
    %v613 = vmax.f32 %v433, 0.0
    %v614 = vmax.f32 %v484, 0.0
    %v615 = vmax.f32 %v486, 0.0
    %v616 = vmax.f32 %v537, 0.0
    %v617 = vmax.f32 %v539, 0.0
    %v618 = vmax.f32 %v590, 0.0
    %v619 = vmax.f32 %v592, 0.0
    %v620 = vmax.f32 %v437, 0.0
    %v621 = vmax.f32 %v439, 0.0
    %v622 = vmax.f32 %v490, 0.0
    %v623 = vmax.f32 %v492, 0.0
    %v624 = vmax.f32 %v543, 0.0
    %v625 = vmax.f32 %v545, 0.0
    %v626 = vmax.f32 %v596, 0.0
    %v627 = vmax.f32 %v598, 0.0
    %v628 = vmax.f32 %v441, 0.0
    %v629 = vmax.f32 %v443, 0.0
    %v630 = vmax.f32 %v494, 0.0
    %v631 = vmax.f32 %v496, 0.0
    %v632 = vmax.f32 %v547, 0.0
    %v633 = vmax.f32 %v549, 0.0
    %v634 = vmax.f32 %v600, 0.0
    %v635 = vmax.f32 %v602, 0.0
    %v636 = vpack.c.bf16 %v612, %v604
    %v637 = vpack.c.bf16 %v613, %v605
    %v638 = vpack.c.bf16 %v614, %v606
    %v639 = vpack.c.bf16 %v615, %v607
    %v640 = vpack.c.bf16 %v616, %v608
    %v641 = vpack.c.bf16 %v617, %v609
    %v642 = vpack.c.bf16 %v618, %v610
    %v643 = vpack.c.bf16 %v619, %v611
    %v644 = vpack.c.bf16 %v628, %v620
    %v645 = vpack.c.bf16 %v629, %v621
    %v646 = vpack.c.bf16 %v630, %v622
    %v647 = vpack.c.bf16 %v631, %v623
    %v648 = vpack.c.bf16 %v632, %v624
    %v649 = vpack.c.bf16 %v633, %v625
    %v650 = vpack.c.bf16 %v634, %v626
    %v651 = vpack.c.bf16 %v635, %v627
    %653 = vset.pattern.permute.xlu0 0
    %654 = vperm.xlu0 %653, %v350
    %v655 = vpop.permute.xlu0 %654
    %658 = vset.pattern.permute.xlu0 0
    %659 = vperm.xlu0 %658, %v351
    %v660 = vpop.permute.xlu0 %659
    %v664 = vunpack.c.l.b16 %v348
    %v665 = vunpack.c.l.b16 %v349
    %v666 = vpack.c.b16 %v665, %v664
    %v668 = vsel %vm385, %v666, 0
    %670 = vmatprep.subr.bf16.mxu0 0
    %671 = vmatpush1.bf16.msra.mxu0 0
    %672 = vmatprep.subr.bf16.mxu0 0
    %673 = vmatpush1.bf16.msra.mxu0 0
    %674 = vmatprep.subr.bf16.mxu0 0
    %675 = vmatpush1.bf16.msra.mxu0 0
    %676 = vmatprep.subr.bf16.mxu0 0
    %677 = vmatpush1.bf16.msra.mxu0 0
    %678 = vmatprep.subr.bf16.mxu0 0
    %679 = vmatpush1.bf16.msra.mxu0 0
    %680 = vmatprep.subr.bf16.mxu0 0
    %681 = vmatpush1.bf16.msra.mxu0 0
    %682 = vmatprep.subr.bf16.mxu0 %v645
    %683 = vmatpush1.bf16.msra.mxu0 %v644
    %684 = vmatprep.subr.bf16.mxu0 %v637
    %685 = vmatpush1.bf16.msra.mxu0 %v636
    %686 = vmatprep.subr.bf16.mxu0 0
    %687 = vmatpush2.bf16.msra.mxu0 0
    %688 = vmatprep.subr.bf16.mxu0 0
    %689 = vmatpush2.bf16.msra.mxu0 0
    %690 = vmatprep.subr.bf16.mxu0 0
    %691 = vmatpush2.bf16.msra.mxu0 0
    %692 = vmatprep.subr.bf16.mxu0 0
    %693 = vmatpush2.bf16.msra.mxu0 0
    %694 = vmatprep.subr.bf16.mxu0 0
    %695 = vmatpush2.bf16.msra.mxu0 0
    %696 = vmatprep.subr.bf16.mxu0 0
    %697 = vmatpush2.bf16.msra.mxu0 0
    %698 = vmatprep.subr.bf16.mxu0 0
    %699 = vmatpush2.bf16.msra.mxu0 0
    %700 = vmatprep.subr.bf16.mxu0 0
    %701 = vmatpush2.bf16.msra.mxu0 0
    %702 = vmatprep.mubr.bf16.mxu0 0
    %703 = vmatmul.mubr.bf16.gmra.mxu0 %v668
    %v704 = vpop.f32.mrf.mxu0
    %v705 = vadd.f32 %v655, %v704
    %v706 = vpop.f32.mrf.mxu0
    %v707 = vadd.f32 %v655, %v706
    %v708 = vpop.f32.mrf.mxu0
    %v709 = vadd.f32 %v660, %v708
    %v710 = vpop.f32.mrf.mxu0
    %v711 = vadd.f32 %v660, %v710
    %712 = vdwg.mxu0
    %713 = vmatprep.subr.bf16.mxu0 0
    %714 = vmatpush1.bf16.msra.mxu0 0
    %715 = vmatprep.subr.bf16.mxu0 0
    %716 = vmatpush1.bf16.msra.mxu0 0
    %717 = vmatprep.subr.bf16.mxu0 0
    %718 = vmatpush1.bf16.msra.mxu0 0
    %719 = vmatprep.subr.bf16.mxu0 0
    %720 = vmatpush1.bf16.msra.mxu0 0
    %721 = vmatprep.subr.bf16.mxu0 0
    %722 = vmatpush1.bf16.msra.mxu0 0
    %723 = vmatprep.subr.bf16.mxu0 0
    %724 = vmatpush1.bf16.msra.mxu0 0
    %725 = vmatprep.subr.bf16.mxu0 %v647
    %726 = vmatpush1.bf16.msra.mxu0 %v646
    %727 = vmatprep.subr.bf16.mxu0 %v639
    %728 = vmatpush1.bf16.msra.mxu0 %v638
    %729 = vmatprep.subr.bf16.mxu0 0
    %730 = vmatpush2.bf16.msra.mxu0 0
    %731 = vmatprep.subr.bf16.mxu0 0
    %732 = vmatpush2.bf16.msra.mxu0 0
    %733 = vmatprep.subr.bf16.mxu0 0
    %734 = vmatpush2.bf16.msra.mxu0 0
    %735 = vmatprep.subr.bf16.mxu0 0
    %736 = vmatpush2.bf16.msra.mxu0 0
    %737 = vmatprep.subr.bf16.mxu0 0
    %738 = vmatpush2.bf16.msra.mxu0 0
    %739 = vmatprep.subr.bf16.mxu0 0
    %740 = vmatpush2.bf16.msra.mxu0 0
    %741 = vmatprep.subr.bf16.mxu0 0
    %742 = vmatpush2.bf16.msra.mxu0 0
    %743 = vmatprep.subr.bf16.mxu0 0
    %744 = vmatpush2.bf16.msra.mxu0 0
    %745 = vmatprep.mubr.bf16.mxu0 0
    %746 = vmatmul.mubr.bf16.gmra.mxu0 %v668
    %v747 = vpop.f32.mrf.mxu0
    %v748 = vadd.f32 %v655, %v747
    %v749 = vpop.f32.mrf.mxu0
    %v750 = vadd.f32 %v655, %v749
    %v751 = vpop.f32.mrf.mxu0
    %v752 = vadd.f32 %v660, %v751
    %v753 = vpop.f32.mrf.mxu0
    %v754 = vadd.f32 %v660, %v753
    %755 = vdwg.mxu0
    %756 = vmatprep.subr.bf16.mxu0 0
    %757 = vmatpush1.bf16.msra.mxu0 0
    %758 = vmatprep.subr.bf16.mxu0 0
    %759 = vmatpush1.bf16.msra.mxu0 0
    %760 = vmatprep.subr.bf16.mxu0 0
    %761 = vmatpush1.bf16.msra.mxu0 0
    %762 = vmatprep.subr.bf16.mxu0 0
    %763 = vmatpush1.bf16.msra.mxu0 0
    %764 = vmatprep.subr.bf16.mxu0 0
    %765 = vmatpush1.bf16.msra.mxu0 0
    %766 = vmatprep.subr.bf16.mxu0 0
    %767 = vmatpush1.bf16.msra.mxu0 0
    %768 = vmatprep.subr.bf16.mxu0 %v649
    %769 = vmatpush1.bf16.msra.mxu0 %v648
    %770 = vmatprep.subr.bf16.mxu0 %v641
    %771 = vmatpush1.bf16.msra.mxu0 %v640
    %772 = vmatprep.subr.bf16.mxu0 0
    %773 = vmatpush2.bf16.msra.mxu0 0
    %774 = vmatprep.subr.bf16.mxu0 0
    %775 = vmatpush2.bf16.msra.mxu0 0
    %776 = vmatprep.subr.bf16.mxu0 0
    %777 = vmatpush2.bf16.msra.mxu0 0
    %778 = vmatprep.subr.bf16.mxu0 0
    %779 = vmatpush2.bf16.msra.mxu0 0
    %780 = vmatprep.subr.bf16.mxu0 0
    %781 = vmatpush2.bf16.msra.mxu0 0
    %782 = vmatprep.subr.bf16.mxu0 0
    %783 = vmatpush2.bf16.msra.mxu0 0
    %784 = vmatprep.subr.bf16.mxu0 0
    %785 = vmatpush2.bf16.msra.mxu0 0
    %786 = vmatprep.subr.bf16.mxu0 0
    %787 = vmatpush2.bf16.msra.mxu0 0
    %788 = vmatprep.mubr.bf16.mxu0 0
    %789 = vmatmul.mubr.bf16.gmra.mxu0 %v668
    %v790 = vpop.f32.mrf.mxu0
    %v791 = vadd.f32 %v655, %v790
    %v792 = vpop.f32.mrf.mxu0
    %v793 = vadd.f32 %v655, %v792
    %v794 = vpop.f32.mrf.mxu0
    %v795 = vadd.f32 %v660, %v794
    %v796 = vpop.f32.mrf.mxu0
    %v797 = vadd.f32 %v660, %v796
    %798 = vdwg.mxu0
    %799 = vmatprep.subr.bf16.mxu0 0
    %800 = vmatpush1.bf16.msra.mxu0 0
    %801 = vmatprep.subr.bf16.mxu0 0
    %802 = vmatpush1.bf16.msra.mxu0 0
    %803 = vmatprep.subr.bf16.mxu0 0
    %804 = vmatpush1.bf16.msra.mxu0 0
    %805 = vmatprep.subr.bf16.mxu0 0
    %806 = vmatpush1.bf16.msra.mxu0 0
    %807 = vmatprep.subr.bf16.mxu0 0
    %808 = vmatpush1.bf16.msra.mxu0 0
    %809 = vmatprep.subr.bf16.mxu0 0
    %810 = vmatpush1.bf16.msra.mxu0 0
    %811 = vmatprep.subr.bf16.mxu0 %v651
    %812 = vmatpush1.bf16.msra.mxu0 %v650
    %813 = vmatprep.subr.bf16.mxu0 %v643
    %814 = vmatpush1.bf16.msra.mxu0 %v642
    %815 = vmatprep.subr.bf16.mxu0 0
    %816 = vmatpush2.bf16.msra.mxu0 0
    %817 = vmatprep.subr.bf16.mxu0 0
    %818 = vmatpush2.bf16.msra.mxu0 0
    %819 = vmatprep.subr.bf16.mxu0 0
    %820 = vmatpush2.bf16.msra.mxu0 0
    %821 = vmatprep.subr.bf16.mxu0 0
    %822 = vmatpush2.bf16.msra.mxu0 0
    %823 = vmatprep.subr.bf16.mxu0 0
    %824 = vmatpush2.bf16.msra.mxu0 0
    %825 = vmatprep.subr.bf16.mxu0 0
    %826 = vmatpush2.bf16.msra.mxu0 0
    %827 = vmatprep.subr.bf16.mxu0 0
    %828 = vmatpush2.bf16.msra.mxu0 0
    %829 = vmatprep.subr.bf16.mxu0 0
    %830 = vmatpush2.bf16.msra.mxu0 0
    %831 = vmatprep.mubr.bf16.mxu0 0
    %832 = vmatmul.mubr.bf16.gmra.mxu0 %v668
    %v833 = vpop.f32.mrf.mxu0
    %v834 = vadd.f32 %v655, %v833
    %v835 = vpop.f32.mrf.mxu0
    %v836 = vadd.f32 %v655, %v835
    %v837 = vpop.f32.mrf.mxu0
    %v838 = vadd.f32 %v660, %v837
    %v839 = vpop.f32.mrf.mxu0
    %v840 = vadd.f32 %v660, %v839
    %841 = vdwg.mxu0
    %v842 = vmax.f32 %v705, 0.0
    %v843 = vmax.f32 %v707, 0.0
    %v844 = vmax.f32 %v748, 0.0
    %v845 = vmax.f32 %v750, 0.0
    %v846 = vmax.f32 %v791, 0.0
    %v847 = vmax.f32 %v793, 0.0
    %v848 = vmax.f32 %v834, 0.0
    %v849 = vmax.f32 %v836, 0.0
    %v850 = vmax.f32 %v709, 0.0
    %v851 = vmax.f32 %v711, 0.0
    %v852 = vmax.f32 %v752, 0.0
    %v853 = vmax.f32 %v754, 0.0
    %v854 = vmax.f32 %v795, 0.0
    %v855 = vmax.f32 %v797, 0.0
    %v856 = vmax.f32 %v838, 0.0
    %v857 = vmax.f32 %v840, 0.0
    %859 = vset.pattern.permute.xlu0 0
    %860 = vperm.xlu0 %859, %v352
    %v861 = vpop.permute.xlu0 %860
    %864 = vset.pattern.permute.xlu0 0
    %865 = vperm.xlu0 %864, %v353
    %v866 = vpop.permute.xlu0 %865
    %v868 = vmul.f32 %v842, %v861
    %v869 = vmul.f32 %v843, %v861
    %v870 = vmul.f32 %v844, %v861
    %v871 = vmul.f32 %v845, %v861
    %v872 = vmul.f32 %v846, %v861
    %v873 = vmul.f32 %v847, %v861
    %v874 = vmul.f32 %v848, %v861
    %v875 = vmul.f32 %v849, %v861
    %v876 = vmul.f32 %v850, %v866
    %v877 = vmul.f32 %v851, %v866
    %v878 = vmul.f32 %v852, %v866
    %v879 = vmul.f32 %v853, %v866
    %v880 = vmul.f32 %v854, %v866
    %v881 = vmul.f32 %v855, %v866
    %v882 = vmul.f32 %v856, %v866
    %v883 = vmul.f32 %v857, %v866
    %v884 = vadd.f32 %v868, %v876
    %v885 = vrot.slane %v884, 4
    %v886 = vadd.f32 %v884, %v885
    %v887 = vrot.slane %v886, 2
    %v888 = vadd.f32 %v886, %v887
    %v889 = vrot.slane %v888, 1
    %v890 = vadd.f32 %v888, %v889
    %v891 = vadd.f32 %v869, %v877
    %v892 = vrot.slane %v891, 4
    %v893 = vadd.f32 %v891, %v892
    %v894 = vrot.slane %v893, 2
    %v895 = vadd.f32 %v893, %v894
    %v896 = vrot.slane %v895, 1
    %v897 = vadd.f32 %v895, %v896
    %v898 = vadd.f32 %v870, %v878
    %v899 = vrot.slane %v898, 4
    %v900 = vadd.f32 %v898, %v899
    %v901 = vrot.slane %v900, 2
    %v902 = vadd.f32 %v900, %v901
    %v903 = vrot.slane %v902, 1
    %v904 = vadd.f32 %v902, %v903
    %v905 = vadd.f32 %v871, %v879
    %v906 = vrot.slane %v905, 4
    %v907 = vadd.f32 %v905, %v906
    %v908 = vrot.slane %v907, 2
    %v909 = vadd.f32 %v907, %v908
    %v910 = vrot.slane %v909, 1
    %v911 = vadd.f32 %v909, %v910
    %v912 = vadd.f32 %v872, %v880
    %v913 = vrot.slane %v912, 4
    %v914 = vadd.f32 %v912, %v913
    %v915 = vrot.slane %v914, 2
    %v916 = vadd.f32 %v914, %v915
    %v917 = vrot.slane %v916, 1
    %v918 = vadd.f32 %v916, %v917
    %v919 = vadd.f32 %v873, %v881
    %v920 = vrot.slane %v919, 4
    %v921 = vadd.f32 %v919, %v920
    %v922 = vrot.slane %v921, 2
    %v923 = vadd.f32 %v921, %v922
    %v924 = vrot.slane %v923, 1
    %v925 = vadd.f32 %v923, %v924
    %v926 = vadd.f32 %v874, %v882
    %v927 = vrot.slane %v926, 4
    %v928 = vadd.f32 %v926, %v927
    %v929 = vrot.slane %v928, 2
    %v930 = vadd.f32 %v928, %v929
    %v931 = vrot.slane %v930, 1
    %v932 = vadd.f32 %v930, %v931
    %v933 = vadd.f32 %v875, %v883
    %v934 = vrot.slane %v933, 4
    %v935 = vadd.f32 %v933, %v934
    %v936 = vrot.slane %v935, 2
    %v937 = vadd.f32 %v935, %v936
    %v938 = vrot.slane %v937, 1
    %v939 = vadd.f32 %v937, %v938
    %941 = vset.pattern.permute.xlu0 0
    %942 = vperm.xlu0 %941, %v354
    %v943 = vpop.permute.xlu0 %942
    %v945 = vlaneseq
    %v946 = vshrl.u32 %v945, 7
    %v947 = vsub.s32 0, %v946
    %v948 = vrot.slane %v943, %v947
    %v949 = vadd.f32 %v890, %v948
    %v950 = vadd.f32 %v897, %v948
    %v951 = vadd.f32 %v904, %v948
    %v952 = vadd.f32 %v911, %v948
    %v953 = vadd.f32 %v918, %v948
    %v954 = vadd.f32 %v925, %v948
    %v955 = vadd.f32 %v932, %v948
    %v956 = vadd.f32 %v939, %v948
    %957 = vst [vmem:[#allocation3] sm:$0x1] %v949
    %958 = vst [vmem:[#allocation3 + $0x1] sm:$0x1] %v950
    %959 = vst [vmem:[#allocation3 + $0x2] sm:$0x1] %v951
    %960 = vst [vmem:[#allocation3 + $0x3] sm:$0x1] %v952
    %961 = vst [vmem:[#allocation3 + $0x4] sm:$0x1] %v953
    %962 = vst [vmem:[#allocation3 + $0x5] sm:$0x1] %v954
    %963 = vst [vmem:[#allocation3 + $0x6] sm:$0x1] %v955
    %964 = vst [vmem:[#allocation3 + $0x7] sm:$0x1] %v956
    // Predicated region
    $region42: #{_pair_step.1} parent=1 // pred_check
      _
    $region43: #{_pair_step.1} parent=1 // pred_check_branch
      %966 = sbr.rel (0) target = $region45
    $region44: #{_pair_step.1} parent=1 // pred_region
      %s968 = ssub.s32 128, 128
      %969 = vsyncadd [#allocation4], %s968
      %s971 = sshll.u32 [#allocation3], 4
      %s972 = int_to_ptr.vmem [resolvable:$true] %s971
      %974 = dma.vmem_to_hbm [thread:$0]  %s972, 128, %s10, [#allocation4]
    $region45: #{_pair_step.1} parent=1 // pred_fallthru
      _
    // Predicated region
    $region46: #{_pair_step.1} parent=1 // pred_check
      _
    $region47: #{_pair_step.1} parent=1 // pred_check_branch
      %976 = sbr.rel (0) target = $region49
    $region48: #{_pair_step.1} parent=1 // pred_region
      %977 = dma.done [#allocation4], 128
    $region49: #{_pair_step.1} parent=1 // pred_fallthru
      _
    %978 = vsyncpa [#allocation4], 1

</llo_original>
